<compile_context>
chip_gen: v7x
topology: tpu7x:2x2x1
jax: 0.10.0
libtpu: 0.0.40
codegen_flags: <defaults>
</compile_context>

<pallas_src>
import functools

import jax
import jax.numpy as jnp
from jax.experimental import pallas as pl
from jax.experimental.pallas import tpu as pltpu

_LANE = 128            # vreg lane width
_SUBLANE = 8           # block sublane dim must be a multiple of this (or full extent)
_BLOCK_BYTES = 2 << 20  # ~2 MiB input block -> ~8 MiB live (in+out, double-buffered);
                        # fits default scoped VMEM on v5e/v6e/v7x.


def _select3(c, vals):
    """Pick vals[c] (c in {0,1,2}); vals are compile-time Python floats."""
    return jnp.where(c == 0, vals[0], jnp.where(c == 1, vals[1], vals[2]))


def _meanshift_kernel(x_ref, o_ref, *, bias, inv_std):
    # x_ref / o_ref: (1, 1, rows, 128) lane-dense spatial tile of one (batch, channel) plane.
    c = pl.program_id(1)                       # channel index comes from the grid
    x = x_ref[...]
    if any(s != 1.0 for s in inv_std):         # static check: module hardcodes std=(1,1,1)
        x = x * _select3(c, inv_std).astype(x.dtype)
    o_ref[...] = x + _select3(c, bias).astype(x.dtype)


def _pick_rows(s128: int, max_rows: int) -> int:
    """Sublane rows per block: full extent, or a multiple of 8 that divides s128."""
    if s128 <= max_rows:
        return s128                             # full extent is always a legal block dim
    for r in range(max_rows - max_rows % _SUBLANE, _SUBLANE - 1, -_SUBLANE):
        if s128 % r == 0:                       # no extra spatial padding needed
            return r
    return max_rows - max_rows % _SUBLANE       # fall back: pad spatial rows


@functools.partial(jax.jit, static_argnames=("rgb_range", "sign", "data_type"))
def mean_shift(x, *, rgb_range: int = 1, sign: int = -1, data_type: str = "DIV2K"):
    """Pallas implementation of MeanShift.forward for NCHW input with C == 3."""
    if data_type == "DIV2K":
        rgb_mean = (0.4488, 0.4371, 0.4040)
    elif data_type == "DF2K":
        rgb_mean = (0.4690, 0.4490, 0.4036)
    else:
        raise NotImplementedError(f"Unknown data type for MeanShift: {data_type}.")
    rgb_std = (1.0, 1.0, 1.0)

    N, C, H, W = x.shape
    assert C == 3, "MeanShift expects 3 input channels"
    HW = H * W

    # Compile-time per-channel constants (baked into the kernel body; no extra inputs).
    bias = tuple(float(sign) * float(rgb_range) * m / s for m, s in zip(rgb_mean, rgb_std))
    inv_std = tuple(1.0 / s for s in rgb_std)

    # Lane-dense spatial layout: view each (n, c) plane as (s_pad rows x 128 lanes).
    itemsize = jnp.dtype(x.dtype).itemsize
    max_rows = max(_SUBLANE,
                   (_BLOCK_BYTES // (_LANE * itemsize)) // _SUBLANE * _SUBLANE)
    s128 = pl.cdiv(HW, _LANE)                   # spatial rows of 128 lanes (ceil)
    rows = _pick_rows(s128, max_rows)
    s_pad = pl.cdiv(s128, rows) * rows
    hw_pad = s_pad * _LANE

    x_flat = x.reshape(N, C, HW)
    if hw_pad != HW:
        x_flat = jnp.pad(x_flat, ((0, 0), (0, 0), (0, hw_pad - HW)))
    x4 = x_flat.reshape(N, C, s_pad, _LANE)

    kernel = functools.partial(_meanshift_kernel, bias=bias, inv_std=inv_std)

    out4 = pl.pallas_call(
        kernel,
        out_shape=jax.ShapeDtypeStruct((N, C, s_pad, _LANE), x.dtype),
        grid_spec=pltpu.PrefetchScalarGridSpec(
            num_scalar_prefetch=0,
            grid=(N, C, s_pad // rows),
            in_specs=[pl.BlockSpec((1, 1, rows, _LANE), lambda n, c, s: (n, c, s, 0))],
            out_specs=pl.BlockSpec((1, 1, rows, _LANE), lambda n, c, s: (n, c, s, 0)),
        ),
        compiler_params=pltpu.CompilerParams(
            dimension_semantics=("parallel", "parallel", "parallel")),
    )(x4)

    return out4.reshape(N, C, hw_pad)[..., :HW].reshape(N, C, H, W)


def _reference(x, rgb_range=1, sign=-1, data_type="DIV2K"):
    rgb_mean = {"DIV2K": (0.4488, 0.4371, 0.4040),
                "DF2K": (0.4690, 0.4490, 0.4036)}[data_type]
    std = jnp.asarray((1.0, 1.0, 1.0), x.dtype)
    w = jnp.eye(3, dtype=x.dtype) / std[:, None]
    b = sign * rgb_range * jnp.asarray(rgb_mean, x.dtype) / std
    return jnp.einsum("oc,nchw->nohw", w, x) + b[None, :, None, None]


if __name__ == "__main__":
    key = jax.random.PRNGKey(0)
    # small NCHW input consistent with the module: batch=2, channels=3, spatial=16x16
    x = jax.random.uniform(key, (2, 3, 16, 16), dtype=jnp.float32)
    y = jax.block_until_ready(mean_shift(x, rgb_range=255, sign=-1, data_type="DIV2K"))
    y_ref = _reference(x, rgb_range=255, sign=-1, data_type="DIV2K")
    assert y.shape == x.shape and y.dtype == x.dtype
    assert jnp.allclose(y, y_ref, atol=1e-4, rtol=1e-4)

    # odd spatial size exercises the lane-padding path (HW not a multiple of 128)
    x2 = jax.random.uniform(jax.random.PRNGKey(1), (1, 3, 10, 13), dtype=jnp.float32)
    y2 = jax.block_until_ready(mean_shift(x2, rgb_range=255, sign=1, data_type="DF2K"))
    y2_ref = _reference(x2, rgb_range=255, sign=1, data_type="DF2K")
    assert jnp.allclose(y2, y2_ref, atol=1e-4, rtol=1e-4)

    print("KERNEL_OK")
</pallas_src>

<mosaic_0001>
module attributes {stable_mosaic.version = 11 : i64} {
  func.func @_meanshift_kernel(%arg0: i32, %arg1: i32, %arg2: i32, %arg3: memref<1x1x2x128xf32, #tpu.memory_space<vmem>>, %arg4: memref<1x1x2x128xf32, #tpu.memory_space<vmem>>) attributes {dimension_semantics = [#tpu.dimension_semantics<parallel>, #tpu.dimension_semantics<parallel>, #tpu.dimension_semantics<parallel>], iteration_bounds = array<i64: 2, 3, 1>, scalar_prefetch = 0 : i64, scratch_operands = 0 : i64, tpu.core_type = #tpu.core_type<tc>, window_params = [{transform_indices = @transform_0, window_bounds = array<i64: 1, 1, 2, 128>}, {transform_indices = @transform_1, window_bounds = array<i64: 1, 1, 2, 128>}]} {
    %c0 = arith.constant 0 : index
    %c0_0 = arith.constant 0 : index
    %c0_1 = arith.constant 0 : index
    %c0_2 = arith.constant 0 : index
    %0 = vector.load %arg3[%c0, %c0_0, %c0_1, %c0_2] : memref<1x1x2x128xf32, #tpu.memory_space<vmem>>, vector<1x1x2x128xf32>
    %c0_i32 = arith.constant 0 : i32
    %1 = arith.cmpi eq, %arg1, %c0_i32 : i32
    %c1_i32 = arith.constant 1 : i32
    %2 = arith.cmpi eq, %arg1, %c1_i32 : i32
    %cst = arith.constant -111.460503 : f32
    %cst_3 = arith.constant -1.030200e+02 : f32
    %3 = arith.select %2, %cst, %cst_3 : f32
    %cst_4 = arith.constant -1.144440e+02 : f32
    %4 = arith.select %1, %cst_4, %3 : f32
    %5 = vector.broadcast %4 : f32 to vector<1x1x2x128xf32>
    %6 = arith.addf %0, %5 : vector<1x1x2x128xf32>
    %c0_5 = arith.constant 0 : index
    %c0_6 = arith.constant 0 : index
    %c0_7 = arith.constant 0 : index
    %c0_8 = arith.constant 0 : index
    %7 = vector.load %arg4[%c0_5, %c0_6, %c0_7, %c0_8] : memref<1x1x2x128xf32, #tpu.memory_space<vmem>>, vector<1x1x2x128xf32>
    tpu.vector_store %arg4[%c0_5, %c0_6, %c0_7, %c0_8], %6 {strides = array<i32>} : memref<1x1x2x128xf32, #tpu.memory_space<vmem>>, vector<1x1x2x128xf32>,
    return
  }
  func.func @transform_0(%arg0: i32, %arg1: i32, %arg2: i32) -> (i32, i32, i32, i32) {
    %c0_i32 = arith.constant 0 : i32
    %c0_i32_0 = arith.constant 0 : i32
    return %arg0, %arg1, %arg2, %c0_i32 : i32, i32, i32, i32
  }
  func.func @transform_1(%arg0: i32, %arg1: i32, %arg2: i32) -> (i32, i32, i32, i32) {
    %c0_i32 = arith.constant 0 : i32
    %c0_i32_0 = arith.constant 0 : i32
    return %arg0, %arg1, %arg2, %c0_i32 : i32, i32, i32, i32
  }
}

</mosaic_0001>

<llo_original>
// kernel: mean_shift.1
$region0: #{mean_shift.1}
  #allocation0 [shape = 'u32[]', space=smem, size = 0x4, offset = 0x4, fixed_abs, tag = 'smem constant byte address 0x4 - core index']
  #allocation1 [shape = 'u32[144,128]{1,0:T(1,128)}', space=vmem, size = 0x12000, scoped, tag = 'internal scratch']
  %s0 = inlined_call_operand.vmem [shape: f32[2,3,2,128], index: 0, kind: input, shape index: {}]
  %s1 = inlined_call_operand.vmem [shape: f32[2,3,2,128], index: 1, kind: output, shape index: {}]
  %s2 = sld [smem:[#allocation0]]
  $region37: #{mean_shift.1} parent=0
    _
  %s4 = ssub.s32 1, %s2
  %s5 = scalar_select 0, %s4, %s2
  loop: start=0, step=1, limit=8
  $region2: #{mean_shift.1} parent=0 // loop_pre_header
    _
  $region3: #{mean_shift.1} parent=0 // loop_header
    %s7 = sphi 0, %s11
    %p8 = scmp.ge.s32.totalorder %s7, 8
    %s14 = sphi 0, %s33
    %s15 = sphi 0, %s29
    %s16 = sphi 0, %s25
    %s17 = sphi 0, %s14
    %s18 = sphi 0, %s15
    %s19 = sphi 0, %s16
    %s20 = sphi 0, %s17
    %s21 = sphi 0, %s18
    %s22 = sphi 0, %s19
    %s40 = sphi 0, %s42
    %s43 = sphi 0, %s40
    %s44 = sphi 0, %s43
    %s60 = sphi 0, %s44
    %s70 = sphi 0, %s72
    %s73 = sphi 0, %s70
    %s74 = sphi 0, %s73
    %s90 = sphi 0, %s74
  $region4: #{mean_shift.1} parent=0 // loop_header_branch
    %10 = sbr.rel (%p8) target = $region8
  $region5: #{mean_shift.1} parent=0 // loop_body
    %s12 = ssub.s32 %s7, 1
    %s13 = ssub.s32 %s7, 2
    %s23 = sadd.s32 1, %s16
    %p24 = scmp.ge.s32.totalorder %s23, 1
    %s25 = scalar_select %p24, 0, %s23
    %s26 = sadd.s32 1, %s15
    %s27 = scalar_select %p24, %s26, %s15
    %p28 = scmp.ge.s32.totalorder %s27, 3
    %s29 = scalar_select %p28, 0, %s27
    %s30 = sadd.s32 1, %s14
    %s31 = scalar_select %p28, %s30, %s14
    %p32 = scmp.ge.s32.totalorder %s31, 2
    %s33 = scalar_select %p32, 0, %s31
    %s34 = ssub.s32 %s14, %s33
    %s35 = ssub.s32 %s15, %s29
    %s36 = sor.u32 %s34, %s35
    %s37 = ssub.s32 %s16, %s25
    %s38 = sor.u32 %s36, %s37
    %p39 = scmp.eq.s32.totalorder %s38, 0
    %s41 = sadd.s32 %s40, 1
    %s42 = scalar_select %p39, %s40, %s41
    %p45 = pneg %p39
    %p46 = scmp.eq.s32.totalorder %s7, 5
    %p47 = por %p45, %p46
    %p48 = scmp.ne.s32.totalorder %s40, %s43
    %p49 = scmp.eq.s32.totalorder %s7, 0
    %p50 = por %p48, %p49
    %p51 = scmp.ne.s32.totalorder %s40, %s43
    %p52 = scmp.eq.s32.totalorder %s12, 5
    %p53 = por %p51, %p52
    %p54 = scmp.ne.s32.totalorder %s43, %s44
    %p55 = scmp.eq.s32.totalorder %s12, 0
    %p56 = por %p54, %p55
    %p57 = scmp.ne.s32.totalorder %s43, %s44
    %p58 = scmp.eq.s32.totalorder %s13, 5
    %p59 = por %p57, %p58
    %p61 = scmp.ne.s32.totalorder %s44, %s60
    %p62 = scmp.eq.s32.totalorder %s13, 0
    %p63 = por %p61, %p62
    %s64 = ssub.s32 %s14, %s33
    %s65 = ssub.s32 %s15, %s29
    %s66 = sor.u32 %s64, %s65
    %s67 = ssub.s32 %s16, %s25
    %s68 = sor.u32 %s66, %s67
    %p69 = scmp.eq.s32.totalorder %s68, 0
    %s71 = sadd.s32 %s70, 1
    %s72 = scalar_select %p69, %s70, %s71
    %p75 = pneg %p69
    %p76 = scmp.eq.s32.totalorder %s7, 5
    %p77 = por %p75, %p76
    %p78 = scmp.ne.s32.totalorder %s70, %s73
    %p79 = scmp.eq.s32.totalorder %s7, 0
    %p80 = por %p78, %p79
    %p81 = scmp.ne.s32.totalorder %s70, %s73
    %p82 = scmp.eq.s32.totalorder %s12, 5
    %p83 = por %p81, %p82
    %p84 = scmp.ne.s32.totalorder %s73, %s74
    %p85 = scmp.eq.s32.totalorder %s12, 0
    %p86 = por %p84, %p85
    %p87 = scmp.ne.s32.totalorder %s73, %s74
    %p88 = scmp.eq.s32.totalorder %s13, 5
    %p89 = por %p87, %p88
    %p91 = scmp.ne.s32.totalorder %s74, %s90
    %p92 = scmp.eq.s32.totalorder %s13, 0
    %p93 = por %p91, %p92
    %p94 = scmp.le.s32.totalorder 1, %s7
    %p95 = scmp.lt.s32.totalorder %s7, 7
    %p96 = pnand %p94, %p95
    %p97 = pneg %p96
    // Predicated region
    $region9: #{mean_shift.1} parent=5 // pred_check
      _
    $region10: #{mean_shift.1} parent=5 // pred_check_branch
      %99 = sbr.rel (%p96) target = $region12
    $region11: #{mean_shift.1} parent=5 // pred_region
      %s100 = ssub.s32 %s7, 1
    $region12: #{mean_shift.1} parent=5 // pred_fallthru
      _
    %p101 = scmp.lt.s32.totalorder %s7, 6
    // Predicated region
    $region13: #{mean_shift.1} parent=5 // pred_check
      %p102 = pneg %p101
    $region14: #{mean_shift.1} parent=5 // pred_check_branch
      %104 = sbr.rel (%p102) target = $region16
    $region15: #{mean_shift.1} parent=5 // pred_region
      // Predicated region
      $region17: #{mean_shift.1} parent=15 // pred_check
        %p105 = pneg %p50
      $region18: #{mean_shift.1} parent=15 // pred_check_branch
        %107 = sbr.rel (%p105) target = $region20
      $region19: #{mean_shift.1} parent=15 // pred_region
        %p108 = scmp.lt.s32.totalorder %s14, 1
        %s109 = scalar_select %p108, %s14, 1
        %p110 = scmp.lt.s32.totalorder %s15, 2
        %s111 = scalar_select %p110, %s15, 2
        %p112 = scmp.lt.s32.totalorder %s16, 0
        %s113 = scalar_select %p112, %s16, 0
        %s114 = sadd.s32 %s113, %s111
        %s115 = smul.addr %s109, 3
        %s116 = sadd.s32 %s114, %s115
        %s117 = smul.addr %s116, 2
        %s118 = scalar_lea.vmem %s0, %s117
      $region20: #{mean_shift.1} parent=15 // pred_fallthru
        _
    $region16: #{mean_shift.1} parent=5 // pred_fallthru
      _
    %p119 = scmp.le.s32.totalorder 1, %s7
    %p120 = scmp.lt.s32.totalorder %s7, 7
    %p121 = pnand %p119, %p120
    %p122 = pneg %p121
    // Predicated region
    $region21: #{mean_shift.1} parent=5 // pred_check
      _
    $region22: #{mean_shift.1} parent=5 // pred_check_branch
      %124 = sbr.rel (%p121) target = $region24
    $region23: #{mean_shift.1} parent=5 // pred_region
      %s125 = ssub.s32 %s7, 1
      %p126 = scmp.lt.s32.totalorder %s17, 1
      %s127 = scalar_select %p126, %s17, 1
      %p128 = scmp.lt.s32.totalorder %s18, 2
      %s129 = scalar_select %p128, %s18, 2
      %p130 = scmp.lt.s32.totalorder %s19, 0
      %s131 = scalar_select %p130, %s19, 0
      %s132 = sadd.s32 %s131, %s129
      %s133 = smul.addr %s127, 3
      %s134 = sadd.s32 %s132, %s133
      %s135 = smul.addr %s134, 2
      %s136 = scalar_lea.vmem %s0, %s135
      %p137 = pneg %p56
      %p138 = pneg %p53
      %p139 = pneg %p86
      %p140 = pneg %p83
      %p141 = scmp.lt.s32.totalorder %s17, 1
      %s142 = scalar_select %p141, %s17, 1
      %p143 = scmp.lt.s32.totalorder %s18, 2
      %s144 = scalar_select %p143, %s18, 2
      %p145 = scmp.lt.s32.totalorder %s19, 0
      %s146 = scalar_select %p145, %s19, 0
      %s147 = sadd.s32 %s146, %s144
      %s148 = smul.addr %s142, 3
      %s149 = sadd.s32 %s147, %s148
      %s150 = smul.addr %s149, 2
      %s151 = scalar_lea.vmem %s1, %s150
      %p152 = scmp.lt.s32.totalorder %s17, 1
      %s153 = scalar_select %p152, %s17, 1
      %p154 = scmp.lt.s32.totalorder %s18, 2
      %s155 = scalar_select %p154, %s18, 2
      %p156 = scmp.lt.s32.totalorder %s19, 0
      %s157 = scalar_select %p156, %s19, 0
      %s158 = sadd.s32 %s157, %s155
      %s159 = smul.addr %s153, 3
      %s160 = sadd.s32 %s158, %s159
      %s161 = smul.addr %s160, 2
      %s162 = scalar_lea.vmem %s0, %s161
      %p163 = scmp.lt.s32.totalorder %s17, 1
      %s164 = scalar_select %p163, %s17, 1
      %p165 = scmp.lt.s32.totalorder %s18, 2
      %s166 = scalar_select %p165, %s18, 2
      %p167 = scmp.lt.s32.totalorder %s19, 0
      %s168 = scalar_select %p167, %s19, 0
      %s169 = sadd.s32 %s168, %s166
      %s170 = smul.addr %s164, 3
      %s171 = sadd.s32 %s169, %s170
      %s172 = smul.addr %s171, 2
      %s173 = scalar_lea.vmem %s1, %s172
      %v174 = vld [vmem:[%s162] sm:$0x3]
      %p175 = scmp.eq.s32.totalorder %s18, 0
      %p176 = scmp.eq.s32.totalorder %s18, 1
      %s177 = scalar_select %p176, -111.4605, -103.02
      %s178 = scalar_select %p175, -114.444, %s177
      %v179 = vstv %s178
      %v180 = vadd.f32 %v174, %v179
      %181 = vst [vmem:[%s173] sm:$0x3] %v180
      %p182 = scmp.lt.s32.totalorder %s17, 1
      %s183 = scalar_select %p182, %s17, 1
      %p184 = scmp.lt.s32.totalorder %s18, 2
      %s185 = scalar_select %p184, %s18, 2
      %p186 = scmp.lt.s32.totalorder %s19, 0
      %s187 = scalar_select %p186, %s19, 0
      %s188 = sadd.s32 %s187, %s185
      %s189 = smul.addr %s183, 3
      %s190 = sadd.s32 %s188, %s189
      %s191 = smul.addr %s190, 2
      %s192 = scalar_lea.vmem %s1, %s191
      // Predicated region
      $region25: #{mean_shift.1} parent=23 // pred_check
        %p193 = pneg %p83
      $region26: #{mean_shift.1} parent=23 // pred_check_branch
        %195 = sbr.rel (%p193) target = $region28
      $region27: #{mean_shift.1} parent=23 // pred_region
        _
      $region28: #{mean_shift.1} parent=23 // pred_fallthru
        _
    $region24: #{mean_shift.1} parent=5 // pred_fallthru
      _
    %p196 = scmp.le.s32.totalorder 2, %s7
    // Predicated region
    $region29: #{mean_shift.1} parent=5 // pred_check
      %p197 = pneg %p196
    $region30: #{mean_shift.1} parent=5 // pred_check_branch
      %199 = sbr.rel (%p197) target = $region32
    $region31: #{mean_shift.1} parent=5 // pred_region
      %s200 = ssub.s32 %s7, 2
      // Predicated region
      $region33: #{mean_shift.1} parent=31 // pred_check
        %p201 = pneg %p89
      $region34: #{mean_shift.1} parent=31 // pred_check_branch
        %203 = sbr.rel (%p201) target = $region36
      $region35: #{mean_shift.1} parent=31 // pred_region
        %p204 = scmp.lt.s32.totalorder %s20, 1
        %s205 = scalar_select %p204, %s20, 1
        %p206 = scmp.lt.s32.totalorder %s21, 2
        %s207 = scalar_select %p206, %s21, 2
        %p208 = scmp.lt.s32.totalorder %s22, 0
        %s209 = scalar_select %p208, %s22, 0
        %s210 = sadd.s32 %s209, %s207
        %s211 = smul.addr %s205, 3
        %s212 = sadd.s32 %s210, %s211
        %s213 = smul.addr %s212, 2
        %s214 = scalar_lea.vmem %s1, %s213
      $region36: #{mean_shift.1} parent=31 // pred_fallthru
        _
    $region32: #{mean_shift.1} parent=5 // pred_fallthru
      _
  $region6: #{mean_shift.1} parent=0 // loop_footer
    %s11 = sadd.s32 1, %s7
  $region7: #{mean_shift.1} parent=0 // loop_footer_branch
    %6 = sbr.rel target = $region3
  $region8: #{mean_shift.1} parent=0 // loop_exit
    _

</llo_original>
